<compile_context>
chip_gen: v5e
topology: v5e:2x2
jax: 0.10.0
libtpu: 0.0.40
codegen_flags: <defaults>
</compile_context>

<pallas_src>
import functools
import math

import jax
import jax.numpy as jnp
from jax import lax
from jax.experimental import pallas as pl
from jax.experimental.pallas import tpu as pltpu


# --------------------------------------------------------------------------- #
# Tile helpers                                                                  #
# --------------------------------------------------------------------------- #

def _sublane(dtype):
    """Second-minor alignment by dtype (f32: 8, bf16: 16, int8/fp8: 32)."""
    return {1: 32, 2: 16, 4: 8}.get(jnp.dtype(dtype).itemsize, 8)


def _pick_tile(dim, target, align):
    """Largest tile <= target that is a multiple of `align` and divides `dim`.
    Falls back to the full dim (always a legal block extent)."""
    if dim <= target or dim % align != 0:
        return dim
    t = (target // align) * align
    while t >= align:
        if dim % t == 0:
            return t
        t -= align
    return dim


# --------------------------------------------------------------------------- #
# Linear projection: y = x @ W.T + b  (W kept in torch (N, K) layout)          #
# --------------------------------------------------------------------------- #

def _linear_kernel(x_ref, w_ref, b_ref, o_ref, acc_ref):
    k = pl.program_id(2)

    @pl.when(k == 0)
    def _():
        acc_ref[...] = jnp.zeros_like(acc_ref)

    # NT contraction: x (tm, tk) . w (tn, tk) over the last dim of both.
    acc_ref[...] += lax.dot_general(
        x_ref[...], w_ref[...],
        dimension_numbers=(((1,), (1,)), ((), ())),
        preferred_element_type=jnp.float32)

    @pl.when(k == pl.num_programs(2) - 1)
    def _():
        o_ref[...] = (acc_ref[...]
                      + b_ref[...].astype(jnp.float32)).astype(o_ref.dtype)


def linear(x2d, w, b):
    """x2d: (M, K); w: (N, K) torch-Linear layout; b: (N,).  Returns (M, N)."""
    M, K = x2d.shape
    N = w.shape[0]
    b2 = b.reshape(1, N)

    tm = _pick_tile(M, 512, _sublane(x2d.dtype))   # rows: sublane-aligned or full
    tn = _pick_tile(N, 256, 128)                   # out features: lane-aligned or full
    tk = _pick_tile(K, 1024, 128)                  # reduction: lane-aligned or full

    return pl.pallas_call(
        _linear_kernel,
        out_shape=jax.ShapeDtypeStruct((M, N), x2d.dtype),
        grid_spec=pltpu.PrefetchScalarGridSpec(
            num_scalar_prefetch=0,
            grid=(M // tm, N // tn, K // tk),
            in_specs=[
                pl.BlockSpec((tm, tk), lambda i, j, k: (i, k)),
                pl.BlockSpec((tn, tk), lambda i, j, k: (j, k)),
                pl.BlockSpec((1, tn), lambda i, j, k: (0, j)),
            ],
            out_specs=pl.BlockSpec((tm, tn), lambda i, j, k: (i, j)),
            scratch_shapes=[pltpu.VMEM((tm, tn), jnp.float32)],
        ),
        compiler_params=pltpu.CompilerParams(
            dimension_semantics=("parallel", "parallel", "arbitrary"),
            vmem_limit_bytes=32 * 1024 * 1024),
    )(x2d, w, b2)


# --------------------------------------------------------------------------- #
# Fused flash-style attention, heads looped inside, lane-dense output          #
# --------------------------------------------------------------------------- #

def _mha_attn_kernel(*refs, nheads, d_k, scale, has_bias):
    if has_bias:
        q_ref, k_ref, v_ref, bias_ref, o_ref, m_sc, l_sc, acc_sc = refs
    else:
        q_ref, k_ref, v_ref, o_ref, m_sc, l_sc, acc_sc = refs
        bias_ref = None

    ki = pl.program_id(2)

    @pl.when(ki == 0)
    def _():
        m_sc[...] = jnp.full_like(m_sc, -jnp.inf)
        l_sc[...] = jnp.zeros_like(l_sc)
        acc_sc[...] = jnp.zeros_like(acc_sc)

    if has_bias:
        bias = bias_ref[...]                      # (1, tk) or (tq, tk), f32 additive

    for head in range(nheads):
        lo, hi = head * d_k, (head + 1) * d_k
        q_h = q_ref[:, lo:hi]                     # (tq, d_k), native dtype
        k_h = k_ref[:, lo:hi]                     # (tk, d_k)
        v_h = v_ref[:, lo:hi]                     # (tk, d_k)

        # q @ k^T without an explicit transpose (NT contraction on the MXU).
        s = lax.dot_general(q_h, k_h,
                            dimension_numbers=(((1,), (1,)), ((), ())),
                            preferred_element_type=jnp.float32)
        s = s * jnp.float32(scale)
        if has_bias:
            s = s + bias                          # additive 0 / -1e9 mask bias

        m_prev = m_sc[head]                       # (tq, 1)
        m_new = jnp.maximum(m_prev, jnp.max(s, axis=-1, keepdims=True))
        alpha = jnp.exp(m_prev - m_new)
        p = jnp.exp(s - m_new)                    # (tq, tk)
        l_sc[head] = alpha * l_sc[head] + jnp.sum(p, axis=-1, keepdims=True)
        m_sc[head] = m_new
        acc_sc[head] = alpha * acc_sc[head] + lax.dot_general(
            p.astype(v_h.dtype), v_h,
            dimension_numbers=(((1,), (0,)), ((), ())),
            preferred_element_type=jnp.float32)
        # TODO(synk): nn.Dropout(p=0.1) on p_attn is a training-time stochastic
        # op; eval-mode forward (identity) is implemented here.

    @pl.when(ki == pl.num_programs(2) - 1)
    def _():
        parts = []
        for head in range(nheads):
            l_h = l_sc[head]
            inv = pl.reciprocal(l_h, approx=True)     # EUP vrcp
            inv = inv * (2.0 - l_h * inv)             # one Newton step -> ~f32 exact
            parts.append(acc_sc[head] * inv)
        # Single lane-dense store of the concat-head (tq, d_model) slab.
        o_ref[...] = jnp.concatenate(parts, axis=-1).astype(o_ref.dtype)


def _attention(q, k, v, bias, nheads, scale):
    """q,k,v: (B, S, d_model) in concat-head layout; bias: None or (B, 1|Sq, Sk)
    additive f32.  Returns (B, Sq, d_model) in concat-head layout."""
    B, Sq, d_model = q.shape
    Sk = k.shape[1]
    d_k = d_model // nheads

    tq = _pick_tile(Sq, 256, _sublane(q.dtype))   # sublane-aligned or full
    tk = _pick_tile(Sk, 512, 128)                 # lane-aligned (it is the bias last dim) or full

    in_specs = [
        pl.BlockSpec((None, tq, d_model), lambda b, qi, ki: (b, qi, 0)),
        pl.BlockSpec((None, tk, d_model), lambda b, qi, ki: (b, ki, 0)),
        pl.BlockSpec((None, tk, d_model), lambda b, qi, ki: (b, ki, 0)),
    ]
    operands = [q, k, v]
    has_bias = bias is not None
    if has_bias:
        if bias.shape[1] == 1:                    # (B, 1, Sk) padding mask
            in_specs.append(
                pl.BlockSpec((None, 1, tk), lambda b, qi, ki: (b, 0, ki)))
        else:                                     # (B, Sq, Sk) full mask
            in_specs.append(
                pl.BlockSpec((None, tq, tk), lambda b, qi, ki: (b, qi, ki)))
        operands.append(bias)

    kernel = functools.partial(_mha_attn_kernel, nheads=nheads, d_k=d_k,
                               scale=scale, has_bias=has_bias)
    return pl.pallas_call(
        kernel,
        out_shape=jax.ShapeDtypeStruct((B, Sq, d_model), q.dtype),
        grid_spec=pltpu.PrefetchScalarGridSpec(
            num_scalar_prefetch=0,
            grid=(B, Sq // tq, Sk // tk),
            in_specs=in_specs,
            out_specs=pl.BlockSpec((None, tq, d_model),
                                   lambda b, qi, ki: (b, qi, 0)),
            scratch_shapes=[
                pltpu.VMEM((nheads, tq, 1), jnp.float32),    # running max
                pltpu.VMEM((nheads, tq, 1), jnp.float32),    # running denom
                pltpu.VMEM((nheads, tq, d_k), jnp.float32),  # output accumulator
            ],
        ),
        compiler_params=pltpu.CompilerParams(
            dimension_semantics=("parallel", "parallel", "arbitrary"),
            vmem_limit_bytes=32 * 1024 * 1024),
    )(*operands)


# --------------------------------------------------------------------------- #
# MultiHeadedAttention forward                                                 #
# --------------------------------------------------------------------------- #

def multi_headed_attention(query, key, value, params, h, mask=None):
    """query/key/value: (B, S, d_model); params = (wq,bq, wk,bk, wv,bv, wo,bo)
    with torch-Linear weight layout (out_features, in_features)."""
    wq, bq, wk, bk, wv, bv, wo, bo = params
    B, Sq, d_model = query.shape
    Sk = key.shape[1]
    assert d_model % h == 0
    d_k = d_model // h

    # Projections stay in (B*S, d_model) concat-head layout; no HBM transposes.
    q = linear(query.reshape(B * Sq, d_model), wq, bq).reshape(B, Sq, d_model)
    k = linear(key.reshape(B * Sk, d_model), wk, bk).reshape(B, Sk, d_model)
    v = linear(value.reshape(B * Sk, d_model), wv, bv).reshape(B, Sk, d_model)

    bias = None
    if mask is not None:
        m = jnp.asarray(mask)
        if m.ndim == 2:                      # (B, Sk) -> (B, 1, Sk)
            m = m[:, None, :]
        # Additive bias: 0 where kept, -1e9 where masked (== masked_fill after softmax).
        bias = jnp.where(m == 0, jnp.float32(-1e9), jnp.float32(0.0))

    ctx = _attention(q, k, v, bias, h, 1.0 / math.sqrt(d_k))   # (B, Sq, d_model)
    out = linear(ctx.reshape(B * Sq, d_model), wo, bo)
    return out.reshape(B, Sq, d_model)


# --------------------------------------------------------------------------- #
# Demo / correctness check                                                     #
# --------------------------------------------------------------------------- #

def _reference_mha(query, key, value, params, h, mask=None):
    wq, bq, wk, bk, wv, bv, wo, bo = params
    B, Sq, d_model = query.shape
    Sk = key.shape[1]
    d_k = d_model // h

    def lin(x, w, b):
        return jnp.matmul(x, w.T) + b

    q = lin(query, wq, bq).reshape(B, Sq, h, d_k).transpose(0, 2, 1, 3)
    k = lin(key, wk, bk).reshape(B, Sk, h, d_k).transpose(0, 2, 1, 3)
    v = lin(value, wv, bv).reshape(B, Sk, h, d_k).transpose(0, 2, 1, 3)

    scores = jnp.matmul(q, jnp.swapaxes(k, -2, -1)) / math.sqrt(d_k)
    if mask is not None:
        m = jnp.asarray(mask)
        if m.ndim == 2:
            m = m[:, None, :]
        m = m[:, None, :, :]                 # == mask.unsqueeze(1) in torch
        scores = jnp.where(m == 0, -1e9, scores)
    p = jax.nn.softmax(scores, axis=-1)      # dropout: identity (eval mode)
    x = jnp.matmul(p, v).transpose(0, 2, 1, 3).reshape(B, Sq, d_model)
    return lin(x, wo, bo)


if __name__ == "__main__":
    # Keep reference matmuls at true f32 so it matches the kernel's f32 MXU path.
    jax.config.update("jax_default_matmul_precision", "highest")

    batch, seq, d_model, h = 2, 8, 32, 4
    key0 = jax.random.PRNGKey(0)
    ks = jax.random.split(key0, 12)

    query = jax.random.normal(ks[0], (batch, seq, d_model), jnp.float32)
    key_t = jax.random.normal(ks[1], (batch, seq, d_model), jnp.float32)
    value = jax.random.normal(ks[2], (batch, seq, d_model), jnp.float32)

    def init_linear(kw, kb):
        w = 0.05 * jax.random.normal(kw, (d_model, d_model), jnp.float32)
        b = 0.05 * jax.random.normal(kb, (d_model,), jnp.float32)
        return w, b

    wq, bq = init_linear(ks[3], ks[4])
    wk, bk = init_linear(ks[5], ks[6])
    wv, bv = init_linear(ks[7], ks[8])
    wo, bo = init_linear(ks[9], ks[10])
    params = (wq, bq, wk, bk, wv, bv, wo, bo)

    # Padding mask: batch 1 masks out the last two key positions.
    mask = jnp.ones((batch, 1, seq), jnp.int32).at[1, 0, 6:].set(0)

    out_masked = jax.block_until_ready(
        multi_headed_attention(query, key_t, value, params, h, mask=mask))
    out_plain = jax.block_until_ready(
        multi_headed_attention(query, key_t, value, params, h, mask=None))

    ref_masked = _reference_mha(query, key_t, value, params, h, mask=mask)
    ref_plain = _reference_mha(query, key_t, value, params, h, mask=None)

    assert out_masked.shape == (batch, seq, d_model) and out_masked.dtype == query.dtype
    assert jnp.allclose(out_masked, ref_masked, atol=1e-4, rtol=1e-4)
    assert jnp.allclose(out_plain, ref_plain, atol=1e-4, rtol=1e-4)
    print("KERNEL_OK")
</pallas_src>

<mosaic_0001>
module attributes {stable_mosaic.version = 11 : i64} {
  func.func @_linear_kernel(%arg0: i32, %arg1: i32, %arg2: i32, %arg3: memref<16x32xf32, #tpu.memory_space<vmem>>, %arg4: memref<32x32xf32, #tpu.memory_space<vmem>>, %arg5: memref<1x32xf32, #tpu.memory_space<vmem>>, %arg6: memref<16x32xf32, #tpu.memory_space<vmem>>, %arg7: memref<16x32xf32, #tpu.memory_space<vmem>>) attributes {dimension_semantics = [#tpu.dimension_semantics<parallel>, #tpu.dimension_semantics<parallel>, #tpu.dimension_semantics<arbitrary>], iteration_bounds = array<i64: 1, 1, 1>, scalar_prefetch = 0 : i64, scratch_operands = 1 : i64, tpu.core_type = #tpu.core_type<tc>, window_params = [{transform_indices = @transform_0, window_bounds = array<i64: 16, 32>}, {transform_indices = @transform_1, window_bounds = array<i64: 32, 32>}, {transform_indices = @transform_2, window_bounds = array<i64: 1, 32>}, {transform_indices = @transform_3, window_bounds = array<i64: 16, 32>}]} {
    %c0_i32 = arith.constant 0 : i32
    %0 = arith.cmpi eq, %arg2, %c0_i32 : i32
    %1 = arith.extui %0 : i1 to i32
    %c0_i32_0 = arith.constant 0 : i32
    %2 = arith.cmpi ne, %1, %c0_i32_0 : i32
    scf.if %2 {
      %cst_10 = arith.constant 0.000000e+00 : f32
      %12 = vector.broadcast %cst_10 : f32 to vector<16x32xf32>
      %c0_11 = arith.constant 0 : index
      %c0_12 = arith.constant 0 : index
      %13 = vector.load %arg7[%c0_11, %c0_12] : memref<16x32xf32, #tpu.memory_space<vmem>>, vector<16x32xf32>
      tpu.vector_store %arg7[%c0_11, %c0_12], %12 {strides = array<i32>} : memref<16x32xf32, #tpu.memory_space<vmem>>, vector<16x32xf32>,
    } else {
    }
    %c0 = arith.constant 0 : index
    %c0_1 = arith.constant 0 : index
    %3 = vector.load %arg7[%c0, %c0_1] : memref<16x32xf32, #tpu.memory_space<vmem>>, vector<16x32xf32>
    %c0_2 = arith.constant 0 : index
    %c0_3 = arith.constant 0 : index
    %4 = vector.load %arg3[%c0_2, %c0_3] : memref<16x32xf32, #tpu.memory_space<vmem>>, vector<16x32xf32>
    %c0_4 = arith.constant 0 : index
    %c0_5 = arith.constant 0 : index
    %5 = vector.load %arg4[%c0_4, %c0_5] : memref<32x32xf32, #tpu.memory_space<vmem>>, vector<32x32xf32>
    %cst = arith.constant dense<0.000000e+00> : vector<16x32xf32>
    %6 = tpu.matmul %4, %5, %cst {dimension_numbers = #tpu.dot_dimension_numbers<[1], [1], [0], [0], [0, 0, 1, 0], [], []>, precision = #tpu.contract_precision<fp32>} : vector<16x32xf32>, vector<32x32xf32>, vector<16x32xf32> -> vector<16x32xf32>
    %7 = arith.addf %3, %6 : vector<16x32xf32>
    %c0_6 = arith.constant 0 : index
    %c0_7 = arith.constant 0 : index
    %8 = vector.load %arg7[%c0_6, %c0_7] : memref<16x32xf32, #tpu.memory_space<vmem>>, vector<16x32xf32>
    tpu.vector_store %arg7[%c0_6, %c0_7], %7 {strides = array<i32>} : memref<16x32xf32, #tpu.memory_space<vmem>>, vector<16x32xf32>,
    %c0_i32_8 = arith.constant 0 : i32
    %9 = arith.cmpi eq, %arg2, %c0_i32_8 : i32
    %10 = arith.extui %9 : i1 to i32
    %c0_i32_9 = arith.constant 0 : i32
    %11 = arith.cmpi ne, %10, %c0_i32_9 : i32
    scf.if %11 {
      %c0_10 = arith.constant 0 : index
      %c0_11 = arith.constant 0 : index
      %12 = vector.load %arg7[%c0_10, %c0_11] : memref<16x32xf32, #tpu.memory_space<vmem>>, vector<16x32xf32>
      %c0_12 = arith.constant 0 : index
      %c0_13 = arith.constant 0 : index
      %13 = vector.load %arg5[%c0_12, %c0_13] : memref<1x32xf32, #tpu.memory_space<vmem>>, vector<1x32xf32>
      %14 = vector.broadcast %13 : vector<1x32xf32> to vector<16x32xf32>
      %15 = arith.addf %12, %14 : vector<16x32xf32>
      %c0_14 = arith.constant 0 : index
      %c0_15 = arith.constant 0 : index
      %16 = vector.load %arg6[%c0_14, %c0_15] : memref<16x32xf32, #tpu.memory_space<vmem>>, vector<16x32xf32>
      tpu.vector_store %arg6[%c0_14, %c0_15], %15 {strides = array<i32>} : memref<16x32xf32, #tpu.memory_space<vmem>>, vector<16x32xf32>,
    } else {
    }
    return
  }
  func.func @transform_0(%arg0: i32, %arg1: i32, %arg2: i32) -> (i32, i32) {
    %c0_i32 = arith.constant 0 : i32
    return %arg0, %arg2 : i32, i32
  }
  func.func @transform_1(%arg0: i32, %arg1: i32, %arg2: i32) -> (i32, i32) {
    %c0_i32 = arith.constant 0 : i32
    return %arg1, %arg2 : i32, i32
  }
  func.func @transform_2(%arg0: i32, %arg1: i32, %arg2: i32) -> (i32, i32) {
    %c0_i32 = arith.constant 0 : i32
    %c0_i32_0 = arith.constant 0 : i32
    return %c0_i32, %arg1 : i32, i32
  }
  func.func @transform_3(%arg0: i32, %arg1: i32, %arg2: i32) -> (i32, i32) {
    %c0_i32 = arith.constant 0 : i32
    return %arg0, %arg1 : i32, i32
  }
}

</mosaic_0001>

<llo_original>
// kernel: tpu_custom_call.1
$region0: #{tpu_custom_call.1}
  #allocation0 [shape = 'u32[]', space=smem, size = 0x4, offset = 0x4, fixed_abs, tag = 'smem constant byte address 0x4 - core index']
  #allocation1 [shape = 'u32[72,128]{1,0:T(1,128)}', space=vmem, size = 0x9000, scoped, tag = 'internal scratch']
  #allocation2 [shape = 'f32[16,32]{1,0:T(8,128)}', space=vmem, size = 0x2000, scoped, tag = 'scratch operand']
  %s0 = inlined_call_operand.hbm [shape: f32[16,32], index: 0, kind: input, shape index: {}]
  %s1 = inlined_call_operand.hbm [shape: f32[32,32], index: 1, kind: input, shape index: {}]
  %s2 = inlined_call_operand.vmem [shape: f32[1,32], index: 2, kind: input, shape index: {}]
  %s3 = inlined_call_operand.hbm [shape: f32[16,32], index: 3, kind: output, shape index: {}]
  %s4 = sld [smem:[#allocation0]]
  $region38: #{tpu_custom_call.1} parent=0
    _
  %s6 = ssub.s32 1, %s4
  %s7 = scalar_select 0, %s6, %s4
  $region1: #{tpu_custom_call.1} parent=0
    #allocation3 [shape = 'u8[8192]{0}', space=vmem, size = 0x2000, scoped, tag = 'input window, operand 0, single buffered']
    #allocation4 [shape = 's32[1]{0}', space=sflag, size = 0x4, scoped, tag = 'scoped memory for tpu_custom_call.1']
    #allocation5 [shape = 's32[1]{0}', space=sflag, size = 0x4, scoped, tag = 'scoped memory for tpu_custom_call.1']
    #allocation6 [shape = 'u8[16384]{0}', space=vmem, size = 0x4000, scoped, tag = 'input window, operand 1, single buffered']
    #allocation7 [shape = 's32[1]{0}', space=sflag, size = 0x4, scoped, tag = 'scoped memory for tpu_custom_call.1']
    #allocation8 [shape = 'u8[8192]{0}', space=vmem, size = 0x2000, scoped, tag = 'output window, operand 0, single buffered']
    %8 = vsyncpa [#allocation4], 0
    %9 = vsyncpa [#allocation7], 0
    %10 = vsyncpa [#allocation5], 0
    // Predicated region
    $region2: #{tpu_custom_call.1} parent=1 // pred_check
      _
    $region3: #{tpu_custom_call.1} parent=1 // pred_check_branch
      %12 = sbr.rel (0) target = $region5
    $region4: #{tpu_custom_call.1} parent=1 // pred_region
      %14 = vsyncadd [#allocation4], 0
      %s15 = sshll.u32 %s0, 4
      %s16 = int_to_ptr.hbm [resolvable:$true] %s15
      %s17 = sshll.u32 [#allocation3], 4
      %s18 = int_to_ptr.vmem [resolvable:$true] %s17
      %23 = dma.hbm_to_vmem [thread:$0]  %s16, 256, %s18, [#allocation4], 128, 128, 8
    $region5: #{tpu_custom_call.1} parent=1 // pred_fallthru
      _
    // Predicated region
    $region6: #{tpu_custom_call.1} parent=1 // pred_check
      _
    $region7: #{tpu_custom_call.1} parent=1 // pred_check_branch
      %25 = sbr.rel (0) target = $region9
    $region8: #{tpu_custom_call.1} parent=1 // pred_region
      %27 = vsyncadd [#allocation7], 0
      %s28 = sshll.u32 %s1, 4
      %s29 = int_to_ptr.hbm [resolvable:$true] %s28
      %s30 = sshll.u32 [#allocation6], 4
      %s31 = int_to_ptr.vmem [resolvable:$true] %s30
      %36 = dma.hbm_to_vmem [thread:$0]  %s29, 512, %s31, [#allocation7], 128, 128, 8
    $region9: #{tpu_custom_call.1} parent=1 // pred_fallthru
      _
    // Predicated region
    $region10: #{tpu_custom_call.1} parent=1 // pred_check
      _
    $region11: #{tpu_custom_call.1} parent=1 // pred_check_branch
      %38 = sbr.rel (0) target = $region13
    $region12: #{tpu_custom_call.1} parent=1 // pred_region
      _
    $region13: #{tpu_custom_call.1} parent=1 // pred_fallthru
      _
    // Predicated region
    $region14: #{tpu_custom_call.1} parent=1 // pred_check
      _
    $region15: #{tpu_custom_call.1} parent=1 // pred_check_branch
      %40 = sbr.rel (0) target = $region17
    $region16: #{tpu_custom_call.1} parent=1 // pred_region
      %42 = dma.done [#allocation4], 256
    $region17: #{tpu_custom_call.1} parent=1 // pred_fallthru
      _
    // Predicated region
    $region18: #{tpu_custom_call.1} parent=1 // pred_check
      _
    $region19: #{tpu_custom_call.1} parent=1 // pred_check_branch
      %44 = sbr.rel (0) target = $region21
    $region20: #{tpu_custom_call.1} parent=1 // pred_region
      %46 = dma.done [#allocation7], 512
    $region21: #{tpu_custom_call.1} parent=1 // pred_fallthru
      _
    %p47 = scmp.eq.s32.totalorder 0, 0
    // Predicated region
    $region22: #{tpu_custom_call.1} parent=1 // pred_check
      %p48 = pneg %p47
    $region23: #{tpu_custom_call.1} parent=1 // pred_check_branch
      %50 = sbr.rel (%p48) target = $region25
    $region24: #{tpu_custom_call.1} parent=1 // pred_region
      %vm51 = vcmask 261120
      %52 = vst.msk [vmem:[#allocation2] sm:$0xff] %vm51, 0.0
      %53 = vst.msk [vmem:[#allocation2 + $0x8] sm:$0xff] %vm51, 0.0
    $region25: #{tpu_custom_call.1} parent=1 // pred_fallthru
      _
    %v54 = vld [vmem:[#allocation2] sm:$0xff]
    %v55 = vld [vmem:[#allocation2 + $0x8] sm:$0xff]
    %v56 = vld [vmem:[#allocation3] sm:$0xff]
    %v57 = vld [vmem:[#allocation3 + $0x8] sm:$0xff]
    %v58 = vld [vmem:[#allocation6] sm:$0xff]
    %v59 = vld [vmem:[#allocation6 + $0x8] sm:$0xff]
    %v60 = vld [vmem:[#allocation6 + $0x10] sm:$0xff]
    %v61 = vld [vmem:[#allocation6 + $0x18] sm:$0xff]
    %vm62 = vcmask 261120
    %v64 = vsel %vm62, %v56, 0
    %v67 = vsel %vm62, %v57, 0
    %v70 = vsel %vm62, %v58, 0
    %v73 = vsel %vm62, %v59, 0
    %v76 = vsel %vm62, %v60, 0
    %v79 = vsel %vm62, %v61, 0
    %81 = vmatpush.xpose.msra.mxu0 0.0
    %82 = vmatpush.xpose.msra.mxu0 0.0
    %83 = vmatpush.xpose.msra.mxu0 0.0
    %84 = vmatpush.xpose.msra.mxu0 0.0
    %85 = vmatpush.xpose.msra.mxu0 0.0
    %86 = vmatpush.xpose.msra.mxu0 0.0
    %87 = vmatpush.xpose.msra.mxu0 0.0
    %88 = vmatpush.xpose.msra.mxu0 0.0
    %89 = vmatpush.xpose.msra.mxu0 0.0
    %90 = vmatpush.xpose.msra.mxu0 0.0
    %91 = vmatpush.xpose.msra.mxu0 0.0
    %92 = vmatpush.xpose.msra.mxu0 0.0
    %v93 = vand.u32 %v79, 4294901760
    %94 = vmatpush.xpose.msra.mxu0 %v93
    %v95 = vand.u32 %v76, 4294901760
    %96 = vmatpush.xpose.msra.mxu0 %v95
    %v97 = vand.u32 %v73, 4294901760
    %98 = vmatpush.xpose.msra.mxu0 %v97
    %v99 = vand.u32 %v70, 4294901760
    %100 = vmatpush.xpose.msra.mxu0 %v99
    %v101 = vand.u32 %v64, 4294901760
    %v102 = vsub.f32 %v64, %v101
    %v103 = vand.u32 %v102, 4294901760
    %v104 = vsub.f32 %v102, %v103
    %v105 = vand.u32 %v104, 4294901760
    %106 = vmatmul.f32.gmra.mxu0 %v105
    %v107 = vpop.f32.mrf.mxu0
    %v108 = vadd.f32 0.0, %v107
    %v109 = vand.u32 %v67, 4294901760
    %v110 = vsub.f32 %v67, %v109
    %v111 = vand.u32 %v110, 4294901760
    %v112 = vsub.f32 %v110, %v111
    %v113 = vand.u32 %v112, 4294901760
    %114 = vmatmul.f32.gmra.mxu0 %v113
    %v115 = vpop.f32.mrf.mxu0
    %v116 = vadd.f32 0.0, %v115
    %117 = vdwg.mxu0
    %118 = vmatpush.xpose.msra.mxu0 0.0
    %119 = vmatpush.xpose.msra.mxu0 0.0
    %120 = vmatpush.xpose.msra.mxu0 0.0
    %121 = vmatpush.xpose.msra.mxu0 0.0
    %122 = vmatpush.xpose.msra.mxu0 0.0
    %123 = vmatpush.xpose.msra.mxu0 0.0
    %124 = vmatpush.xpose.msra.mxu0 0.0
    %125 = vmatpush.xpose.msra.mxu0 0.0
    %126 = vmatpush.xpose.msra.mxu0 0.0
    %127 = vmatpush.xpose.msra.mxu0 0.0
    %128 = vmatpush.xpose.msra.mxu0 0.0
    %129 = vmatpush.xpose.msra.mxu0 0.0
    %v130 = vand.u32 %v79, 4294901760
    %v131 = vsub.f32 %v79, %v130
    %v132 = vand.u32 %v131, 4294901760
    %v133 = vsub.f32 %v131, %v132
    %v134 = vand.u32 %v133, 4294901760
    %135 = vmatpush.xpose.msra.mxu0 %v134
    %v136 = vand.u32 %v76, 4294901760
    %v137 = vsub.f32 %v76, %v136
    %v138 = vand.u32 %v137, 4294901760
    %v139 = vsub.f32 %v137, %v138
    %v140 = vand.u32 %v139, 4294901760
    %141 = vmatpush.xpose.msra.mxu0 %v140
    %v142 = vand.u32 %v73, 4294901760
    %v143 = vsub.f32 %v73, %v142
    %v144 = vand.u32 %v143, 4294901760
    %v145 = vsub.f32 %v143, %v144
    %v146 = vand.u32 %v145, 4294901760
    %147 = vmatpush.xpose.msra.mxu0 %v146
    %v148 = vand.u32 %v70, 4294901760
    %v149 = vsub.f32 %v70, %v148
    %v150 = vand.u32 %v149, 4294901760
    %v151 = vsub.f32 %v149, %v150
    %v152 = vand.u32 %v151, 4294901760
    %153 = vmatpush.xpose.msra.mxu0 %v152
    %v154 = vand.u32 %v64, 4294901760
    %155 = vmatmul.f32.gmra.mxu0 %v154
    %v156 = vpop.f32.mrf.mxu0
    %v157 = vadd.f32 %v108, %v156
    %v158 = vand.u32 %v67, 4294901760
    %159 = vmatmul.f32.gmra.mxu0 %v158
    %v160 = vpop.f32.mrf.mxu0
    %v161 = vadd.f32 %v116, %v160
    %162 = vdwg.mxu0
    %163 = vmatpush.xpose.msra.mxu0 0.0
    %164 = vmatpush.xpose.msra.mxu0 0.0
    %165 = vmatpush.xpose.msra.mxu0 0.0
    %166 = vmatpush.xpose.msra.mxu0 0.0
    %167 = vmatpush.xpose.msra.mxu0 0.0
    %168 = vmatpush.xpose.msra.mxu0 0.0
    %169 = vmatpush.xpose.msra.mxu0 0.0
    %170 = vmatpush.xpose.msra.mxu0 0.0
    %171 = vmatpush.xpose.msra.mxu0 0.0
    %172 = vmatpush.xpose.msra.mxu0 0.0
    %173 = vmatpush.xpose.msra.mxu0 0.0
    %174 = vmatpush.xpose.msra.mxu0 0.0
    %v175 = vand.u32 %v79, 4294901760
    %v176 = vsub.f32 %v79, %v175
    %177 = vmatpush.xpose.msra.mxu0 %v176
    %v178 = vand.u32 %v76, 4294901760
    %v179 = vsub.f32 %v76, %v178
    %180 = vmatpush.xpose.msra.mxu0 %v179
    %v181 = vand.u32 %v73, 4294901760
    %v182 = vsub.f32 %v73, %v181
    %183 = vmatpush.xpose.msra.mxu0 %v182
    %v184 = vand.u32 %v70, 4294901760
    %v185 = vsub.f32 %v70, %v184
    %186 = vmatpush.xpose.msra.mxu0 %v185
    %v187 = vand.u32 %v64, 4294901760
    %v188 = vsub.f32 %v64, %v187
    %189 = vmatmul.f32.gmra.mxu0 %v188
    %v190 = vpop.f32.mrf.mxu0
    %v191 = vadd.f32 %v157, %v190
    %v192 = vand.u32 %v67, 4294901760
    %v193 = vsub.f32 %v67, %v192
    %194 = vmatmul.f32.gmra.mxu0 %v193
    %v195 = vpop.f32.mrf.mxu0
    %v196 = vadd.f32 %v161, %v195
    %197 = vdwg.mxu0
    %198 = vmatpush.xpose.msra.mxu0 0.0
    %199 = vmatpush.xpose.msra.mxu0 0.0
    %200 = vmatpush.xpose.msra.mxu0 0.0
    %201 = vmatpush.xpose.msra.mxu0 0.0
    %202 = vmatpush.xpose.msra.mxu0 0.0
    %203 = vmatpush.xpose.msra.mxu0 0.0
    %204 = vmatpush.xpose.msra.mxu0 0.0
    %205 = vmatpush.xpose.msra.mxu0 0.0
    %206 = vmatpush.xpose.msra.mxu0 0.0
    %207 = vmatpush.xpose.msra.mxu0 0.0
    %208 = vmatpush.xpose.msra.mxu0 0.0
    %209 = vmatpush.xpose.msra.mxu0 0.0
    %v210 = vand.u32 %v79, 4294901760
    %211 = vmatpush.xpose.msra.mxu0 %v210
    %v212 = vand.u32 %v76, 4294901760
    %213 = vmatpush.xpose.msra.mxu0 %v212
    %v214 = vand.u32 %v73, 4294901760
    %215 = vmatpush.xpose.msra.mxu0 %v214
    %v216 = vand.u32 %v70, 4294901760
    %217 = vmatpush.xpose.msra.mxu0 %v216
    %v218 = vand.u32 %v64, 4294901760
    %v219 = vsub.f32 %v64, %v218
    %v220 = vand.u32 %v219, 4294901760
    %221 = vmatmul.f32.gmra.mxu0 %v220
    %v222 = vpop.f32.mrf.mxu0
    %v223 = vadd.f32 %v191, %v222
    %v224 = vand.u32 %v67, 4294901760
    %v225 = vsub.f32 %v67, %v224
    %v226 = vand.u32 %v225, 4294901760
    %227 = vmatmul.f32.gmra.mxu0 %v226
    %v228 = vpop.f32.mrf.mxu0
    %v229 = vadd.f32 %v196, %v228
    %230 = vdwg.mxu0
    %231 = vmatpush.xpose.msra.mxu0 0.0
    %232 = vmatpush.xpose.msra.mxu0 0.0
    %233 = vmatpush.xpose.msra.mxu0 0.0
    %234 = vmatpush.xpose.msra.mxu0 0.0
    %235 = vmatpush.xpose.msra.mxu0 0.0
    %236 = vmatpush.xpose.msra.mxu0 0.0
    %237 = vmatpush.xpose.msra.mxu0 0.0
    %238 = vmatpush.xpose.msra.mxu0 0.0
    %239 = vmatpush.xpose.msra.mxu0 0.0
    %240 = vmatpush.xpose.msra.mxu0 0.0
    %241 = vmatpush.xpose.msra.mxu0 0.0
    %242 = vmatpush.xpose.msra.mxu0 0.0
    %v243 = vand.u32 %v79, 4294901760
    %v244 = vsub.f32 %v79, %v243
    %v245 = vand.u32 %v244, 4294901760
    %246 = vmatpush.xpose.msra.mxu0 %v245
    %v247 = vand.u32 %v76, 4294901760
    %v248 = vsub.f32 %v76, %v247
    %v249 = vand.u32 %v248, 4294901760
    %250 = vmatpush.xpose.msra.mxu0 %v249
    %v251 = vand.u32 %v73, 4294901760
    %v252 = vsub.f32 %v73, %v251
    %v253 = vand.u32 %v252, 4294901760
    %254 = vmatpush.xpose.msra.mxu0 %v253
    %v255 = vand.u32 %v70, 4294901760
    %v256 = vsub.f32 %v70, %v255
    %v257 = vand.u32 %v256, 4294901760
    %258 = vmatpush.xpose.msra.mxu0 %v257
    %v259 = vand.u32 %v64, 4294901760
    %260 = vmatmul.f32.gmra.mxu0 %v259
    %v261 = vpop.f32.mrf.mxu0
    %v262 = vadd.f32 %v223, %v261
    %v263 = vand.u32 %v67, 4294901760
    %264 = vmatmul.f32.gmra.mxu0 %v263
    %v265 = vpop.f32.mrf.mxu0
    %v266 = vadd.f32 %v229, %v265
    %267 = vdwg.mxu0
    %268 = vmatpush.xpose.msra.mxu0 0.0
    %269 = vmatpush.xpose.msra.mxu0 0.0
    %270 = vmatpush.xpose.msra.mxu0 0.0
    %271 = vmatpush.xpose.msra.mxu0 0.0
    %272 = vmatpush.xpose.msra.mxu0 0.0
    %273 = vmatpush.xpose.msra.mxu0 0.0
    %274 = vmatpush.xpose.msra.mxu0 0.0
    %275 = vmatpush.xpose.msra.mxu0 0.0
    %276 = vmatpush.xpose.msra.mxu0 0.0
    %277 = vmatpush.xpose.msra.mxu0 0.0
    %278 = vmatpush.xpose.msra.mxu0 0.0
    %279 = vmatpush.xpose.msra.mxu0 0.0
    %v280 = vand.u32 %v79, 4294901760
    %281 = vmatpush.xpose.msra.mxu0 %v280
    %v282 = vand.u32 %v76, 4294901760
    %283 = vmatpush.xpose.msra.mxu0 %v282
    %v284 = vand.u32 %v73, 4294901760
    %285 = vmatpush.xpose.msra.mxu0 %v284
    %v286 = vand.u32 %v70, 4294901760
    %287 = vmatpush.xpose.msra.mxu0 %v286
    %v288 = vand.u32 %v64, 4294901760
    %289 = vmatmul.f32.gmra.mxu0 %v288
    %v290 = vpop.f32.mrf.mxu0
    %v291 = vadd.f32 %v262, %v290
    %v292 = vand.u32 %v67, 4294901760
    %293 = vmatmul.f32.gmra.mxu0 %v292
    %v294 = vpop.f32.mrf.mxu0
    %v295 = vadd.f32 %v266, %v294
    %296 = vdwg.mxu0
    %v297 = vadd.f32 %v54, %v291
    %v298 = vadd.f32 %v55, %v295
    %299 = vst.msk [vmem:[#allocation2] sm:$0xff] %vm62, %v297
    %300 = vst.msk [vmem:[#allocation2 + $0x8] sm:$0xff] %vm62, %v298
    // Predicated region
    $region26: #{tpu_custom_call.1} parent=1 // pred_check
      %p301 = pneg %p47
    $region27: #{tpu_custom_call.1} parent=1 // pred_check_branch
      %303 = sbr.rel (%p301) target = $region29
    $region28: #{tpu_custom_call.1} parent=1 // pred_region
      %v304 = vld [vmem:[#allocation2] sm:$0xff]
      %v305 = vld [vmem:[#allocation2 + $0x8] sm:$0xff]
      %v306 = vld [vmem:[%s2] sm:$0x1]
      %v308 = vperm.slane %v306, 0
      %v310 = vadd.f32 %v304, %v308
      %v311 = vadd.f32 %v305, %v308
      %312 = vst.msk [vmem:[#allocation8] sm:$0xff] %vm62, %v310
      %313 = vst.msk [vmem:[#allocation8 + $0x8] sm:$0xff] %vm62, %v311
    $region29: #{tpu_custom_call.1} parent=1 // pred_fallthru
      _
    // Predicated region
    $region30: #{tpu_custom_call.1} parent=1 // pred_check
      _
    $region31: #{tpu_custom_call.1} parent=1 // pred_check_branch
      %315 = sbr.rel (0) target = $region33
    $region32: #{tpu_custom_call.1} parent=1 // pred_region
      %317 = vsyncadd [#allocation5], 0
      %s318 = sshll.u32 [#allocation8], 4
      %s319 = int_to_ptr.vmem [resolvable:$true] %s318
      %s320 = sshll.u32 %s3, 4
      %s321 = int_to_ptr.hbm [resolvable:$true] %s320
      %326 = dma.vmem_to_hbm [thread:$0]  %s319, 256, %s321, [#allocation5], 128, 128, 8
    $region33: #{tpu_custom_call.1} parent=1 // pred_fallthru
      _
    // Predicated region
    $region34: #{tpu_custom_call.1} parent=1 // pred_check
      _
    $region35: #{tpu_custom_call.1} parent=1 // pred_check_branch
      %328 = sbr.rel (0) target = $region37
    $region36: #{tpu_custom_call.1} parent=1 // pred_region
      %330 = dma.done [#allocation5], 256
    $region37: #{tpu_custom_call.1} parent=1 // pred_fallthru
      _
    %331 = vsyncpa [#allocation4], 1
    %332 = vsyncpa [#allocation7], 1
    %333 = vsyncpa [#allocation5], 1

</llo_original>
